<compile_context>
chip_gen: v7x
topology: tpu7x:2x2x1
jax: 0.10.0
libtpu: 0.0.40
codegen_flags: <defaults>
</compile_context>

<pallas_src>
import functools

import jax
import jax.numpy as jnp
from jax import lax
from jax.experimental import pallas as pl
from jax.experimental.pallas import tpu as pltpu

HIDDEN = 32
INPUT = 1
OUTPUT = 1
MAX_T_CHUNK = 128   # time steps processed per grid step


def make_rnn_kernel(t_chunk: int, seq_len: int):
    needs_mask = (seq_len % t_chunk) != 0
    unroll = t_chunk if t_chunk <= 16 else 8

    def rnn_kernel(x_ref, h0_ref, wih_ref, b_ref, whh_t_ref, wout_ref, bout_ref,
                   y_ref, hN_ref, h_scratch, ps):
        c = pl.program_id(0)

        # Load the initial hidden state once, before the first chunk.
        @pl.when(c == 0)
        def _():
            h_scratch[...] = h0_ref[...]

        # Hoisted input projection + fused bias for the WHOLE chunk (INPUT == 1):
        #   pre[t, b, :] = x[t, b] * w_ih_row + (b_ih + b_hh)
        # (T,B,1) * (1,1,H) + (1,1,H) -> (T,B,H), written to VMEM scratch `ps`.
        ps[...] = x_ref[...] * wih_ref[...] + b_ref[...]

        # Load W_hh^T once per chunk; keep it out of the serial loop body.
        whh_t = whh_t_ref[...]                                   # (H, H)

        # Serial recurrence: only h @ W_hh^T + tanh stays on the critical path.
        # h is carried in registers; ps[i] is overwritten in place with h_t so it
        # doubles as the per-chunk hidden-state history for the output head.
        def step(i, h):
            h_new = jnp.tanh(ps[i] + jnp.dot(h, whh_t,
                                             preferred_element_type=jnp.float32))
            if needs_mask:
                valid = c * t_chunk + i < seq_len
                h_new = jnp.where(valid, h_new, h)
            ps[i] = h_new
            return h_new

        h_final = lax.fori_loop(0, t_chunk, step, h_scratch[...], unroll=unroll)
        h_scratch[...] = h_final

        # Output head ONCE per chunk: y[t, b] = sum_h hist[t,b,h] * w_out[h] + b_out,
        # stored as a (T_CHUNK, B) block (no trailing OUTPUT=1 lane).
        y_ref[...] = (jnp.sum(ps[...] * wout_ref[...], axis=-1)
                      + bout_ref[...]).astype(y_ref.dtype)

        # Final hidden state: write only on the last chunk.
        @pl.when(c == pl.num_programs(0) - 1)
        def _():
            hN_ref[...] = h_final.astype(hN_ref.dtype)

    return rnn_kernel


@jax.jit
def rnn_forward(x, h_state, params):
    """x: (B, S, 1) f32 (batch_first); h_state: (1, B, HIDDEN) f32."""
    B, S, _ = x.shape
    w_ih, w_hh, b_ih, b_hh, w_out, b_out = params

    t_chunk = S if S <= MAX_T_CHUNK else MAX_T_CHUNK
    n_chunks = (S + t_chunk - 1) // t_chunk
    s_pad = n_chunks * t_chunk

    # Time-major input for sequential chunking.
    x_tm = jnp.transpose(x, (1, 0, 2))                    # (S, B, 1)
    if s_pad != S:
        x_tm = jnp.pad(x_tm, ((0, s_pad - S), (0, 0), (0, 0)))

    h0 = h_state[0]                                       # (B, HIDDEN)

    # Glue: row-vector weights and a single fused bias.
    wih_row = w_ih.reshape(1, 1, HIDDEN)                  # W_ih is (HIDDEN, 1)
    bias = (b_ih + b_hh).reshape(1, 1, HIDDEN)            # fused rnn biases
    whh_t = w_hh.T                                        # (HIDDEN, HIDDEN)
    wout_row = w_out.reshape(1, 1, HIDDEN)                # W_out is (1, HIDDEN)
    bout = b_out.reshape(1, 1)

    kernel = make_rnn_kernel(t_chunk, S)
    full3 = lambda: pl.BlockSpec((1, 1, HIDDEN), lambda c: (0, 0, 0))

    y_pad, h_n = pl.pallas_call(
        kernel,
        out_shape=(
            jax.ShapeDtypeStruct((s_pad, B), jnp.float32),
            jax.ShapeDtypeStruct((B, HIDDEN), jnp.float32),
        ),
        grid_spec=pltpu.PrefetchScalarGridSpec(
            num_scalar_prefetch=0,
            grid=(n_chunks,),
            in_specs=[
                pl.BlockSpec((t_chunk, B, INPUT), lambda c: (c, 0, 0)),  # x chunk
                pl.BlockSpec((B, HIDDEN), lambda c: (0, 0)),             # h0
                full3(),                                                 # w_ih row
                full3(),                                                 # fused bias
                pl.BlockSpec((HIDDEN, HIDDEN), lambda c: (0, 0)),        # W_hh^T
                full3(),                                                 # w_out row
                pl.BlockSpec((1, 1), lambda c: (0, 0)),                  # b_out
            ],
            out_specs=[
                pl.BlockSpec((t_chunk, B), lambda c: (c, 0)),            # y chunk
                pl.BlockSpec((B, HIDDEN), lambda c: (0, 0)),             # h_N
            ],
            scratch_shapes=[
                pltpu.VMEM((B, HIDDEN), jnp.float32),            # carried hidden state
                pltpu.VMEM((t_chunk, B, HIDDEN), jnp.float32),   # pre-activations / h history
            ],
        ),
        compiler_params=pltpu.CompilerParams(
            dimension_semantics=("arbitrary",),   # sequential hidden-state carry
        ),
    )(x_tm, h0, wih_row, bias, whh_t, wout_row, bout)

    y = jnp.transpose(y_pad[:S], (1, 0))[:, :, None]      # (B, S, OUTPUT)
    return y, h_n[None, :, :]                             # (1, B, HIDDEN)


def init_params(key):
    """Deterministic init matching nn.RNN / nn.Linear parameter shapes."""
    k = jax.random.split(key, 6)
    bound = 1.0 / jnp.sqrt(HIDDEN)
    w_ih = jax.random.uniform(k[0], (HIDDEN, INPUT), jnp.float32, -bound, bound)
    w_hh = jax.random.uniform(k[1], (HIDDEN, HIDDEN), jnp.float32, -bound, bound)
    b_ih = jax.random.uniform(k[2], (HIDDEN,), jnp.float32, -bound, bound)
    b_hh = jax.random.uniform(k[3], (HIDDEN,), jnp.float32, -bound, bound)
    w_out = jax.random.uniform(k[4], (OUTPUT, HIDDEN), jnp.float32, -bound, bound)
    b_out = jax.random.uniform(k[5], (OUTPUT,), jnp.float32, -bound, bound)
    return (w_ih, w_hh, b_ih, b_hh, w_out, b_out)


def rnn_forward_ref(x, h_state, params):
    """Pure-JAX reference of the PyTorch forward, for correctness check."""
    w_ih, w_hh, b_ih, b_hh, w_out, b_out = params
    h = h_state[0]
    outs = []
    for t in range(x.shape[1]):
        h = jnp.tanh(x[:, t, :] @ w_ih.T + b_ih + h @ w_hh.T + b_hh)
        outs.append(h @ w_out.T + b_out)
    return jnp.stack(outs, axis=1), h[None, :, :]


if __name__ == "__main__":
    key = jax.random.PRNGKey(0)
    kp, kx = jax.random.split(key, 2)

    B, S = 2, 8
    params = init_params(kp)
    x = jax.random.normal(kx, (B, S, INPUT), jnp.float32)
    # PyTorch passes h_state=None initially -> zeros of shape (num_layers, B, HIDDEN).
    h_state = jnp.zeros((1, B, HIDDEN), jnp.float32)

    y, h_n = rnn_forward(x, h_state, params)
    jax.block_until_ready((y, h_n))

    y_ref, h_ref = rnn_forward_ref(x, h_state, params)
    assert y.shape == (B, S, OUTPUT) and h_n.shape == (1, B, HIDDEN)
    assert jnp.allclose(y, y_ref, atol=1e-5, rtol=1e-5)
    assert jnp.allclose(h_n, h_ref, atol=1e-5, rtol=1e-5)

    print("KERNEL_OK")
</pallas_src>

<mosaic_0001>
module attributes {stable_mosaic.version = 11 : i64} {
  func.func @rnn_kernel(%arg0: i32, %arg1: memref<8x2x1xf32, #tpu.memory_space<vmem>>, %arg2: memref<2x32xf32, #tpu.memory_space<vmem>>, %arg3: memref<1x1x32xf32, #tpu.memory_space<vmem>>, %arg4: memref<1x1x32xf32, #tpu.memory_space<vmem>>, %arg5: memref<32x32xf32, #tpu.memory_space<vmem>>, %arg6: memref<1x1x32xf32, #tpu.memory_space<vmem>>, %arg7: memref<1x1xf32, #tpu.memory_space<vmem>>, %arg8: memref<8x2xf32, #tpu.memory_space<vmem>>, %arg9: memref<2x32xf32, #tpu.memory_space<vmem>>, %arg10: memref<2x32xf32, #tpu.memory_space<vmem>>, %arg11: memref<8x2x32xf32, #tpu.memory_space<vmem>>) attributes {dimension_semantics = [#tpu.dimension_semantics<arbitrary>], iteration_bounds = array<i64: 1>, scalar_prefetch = 0 : i64, scratch_operands = 2 : i64, tpu.core_type = #tpu.core_type<tc>, window_params = [{transform_indices = @transform_0, window_bounds = array<i64: 8, 2, 1>}, {pipeline_mode = #tpu.pipeline_mode<synchronous>, transform_indices = @transform_1, window_bounds = array<i64: 2, 32>}, {pipeline_mode = #tpu.pipeline_mode<synchronous>, transform_indices = @transform_2, window_bounds = array<i64: 1, 1, 32>}, {pipeline_mode = #tpu.pipeline_mode<synchronous>, transform_indices = @transform_3, window_bounds = array<i64: 1, 1, 32>}, {pipeline_mode = #tpu.pipeline_mode<synchronous>, transform_indices = @transform_4, window_bounds = array<i64: 32, 32>}, {pipeline_mode = #tpu.pipeline_mode<synchronous>, transform_indices = @transform_5, window_bounds = array<i64: 1, 1, 32>}, {pipeline_mode = #tpu.pipeline_mode<synchronous>, transform_indices = @transform_6, window_bounds = array<i64: 1, 1>}, {transform_indices = @transform_7, window_bounds = array<i64: 8, 2>}, {pipeline_mode = #tpu.pipeline_mode<synchronous>, transform_indices = @transform_8, window_bounds = array<i64: 2, 32>}]} {
    %c0_i32 = arith.constant 0 : i32
    %0 = arith.cmpi eq, %arg0, %c0_i32 : i32
    %1 = arith.extui %0 : i1 to i32
    %c0_i32_0 = arith.constant 0 : i32
    %2 = arith.cmpi ne, %1, %c0_i32_0 : i32
    scf.if %2 {
      %c0_71 = arith.constant 0 : index
      %c0_72 = arith.constant 0 : index
      %107 = vector.load %arg2[%c0_71, %c0_72] : memref<2x32xf32, #tpu.memory_space<vmem>>, vector<2x32xf32>
      %c0_73 = arith.constant 0 : index
      %c0_74 = arith.constant 0 : index
      %108 = vector.load %arg10[%c0_73, %c0_74] : memref<2x32xf32, #tpu.memory_space<vmem>>, vector<2x32xf32>
      tpu.vector_store %arg10[%c0_73, %c0_74], %107 {strides = array<i32>} : memref<2x32xf32, #tpu.memory_space<vmem>>, vector<2x32xf32>,
    } else {
    }
    %c0 = arith.constant 0 : index
    %c0_1 = arith.constant 0 : index
    %c0_2 = arith.constant 0 : index
    %3 = vector.load %arg1[%c0, %c0_1, %c0_2] : memref<8x2x1xf32, #tpu.memory_space<vmem>>, vector<8x2x1xf32>
    %c0_3 = arith.constant 0 : index
    %c0_4 = arith.constant 0 : index
    %c0_5 = arith.constant 0 : index
    %4 = vector.load %arg3[%c0_3, %c0_4, %c0_5] : memref<1x1x32xf32, #tpu.memory_space<vmem>>, vector<1x1x32xf32>
    %5 = vector.broadcast %3 : vector<8x2x1xf32> to vector<8x2x32xf32>
    %6 = vector.broadcast %4 : vector<1x1x32xf32> to vector<8x2x32xf32>
    %7 = arith.mulf %5, %6 : vector<8x2x32xf32>
    %c0_6 = arith.constant 0 : index
    %c0_7 = arith.constant 0 : index
    %c0_8 = arith.constant 0 : index
    %8 = vector.load %arg4[%c0_6, %c0_7, %c0_8] : memref<1x1x32xf32, #tpu.memory_space<vmem>>, vector<1x1x32xf32>
    %9 = vector.broadcast %8 : vector<1x1x32xf32> to vector<8x2x32xf32>
    %10 = arith.addf %7, %9 : vector<8x2x32xf32>
    %c0_9 = arith.constant 0 : index
    %c0_10 = arith.constant 0 : index
    %c0_11 = arith.constant 0 : index
    %11 = vector.load %arg11[%c0_9, %c0_10, %c0_11] : memref<8x2x32xf32, #tpu.memory_space<vmem>>, vector<8x2x32xf32>
    tpu.vector_store %arg11[%c0_9, %c0_10, %c0_11], %10 {strides = array<i32>} : memref<8x2x32xf32, #tpu.memory_space<vmem>>, vector<8x2x32xf32>,
    %c0_12 = arith.constant 0 : index
    %c0_13 = arith.constant 0 : index
    %12 = vector.load %arg5[%c0_12, %c0_13] : memref<32x32xf32, #tpu.memory_space<vmem>>, vector<32x32xf32>
    %c0_14 = arith.constant 0 : index
    %c0_15 = arith.constant 0 : index
    %13 = vector.load %arg10[%c0_14, %c0_15] : memref<2x32xf32, #tpu.memory_space<vmem>>, vector<2x32xf32>
    %c0_i32_16 = arith.constant 0 : i32
    %14 = arith.index_cast %c0_i32_16 : i32 to index
    %c0_17 = arith.constant 0 : index
    %c0_18 = arith.constant 0 : index
    %15 = vector.load %arg11[%14, %c0_17, %c0_18] : memref<8x2x32xf32, #tpu.memory_space<vmem>>, vector<1x2x32xf32>
    %16 = vector.shape_cast %15 : vector<1x2x32xf32> to vector<2x32xf32>
    %cst = arith.constant dense<0.000000e+00> : vector<2x32xf32>
    %17 = tpu.matmul %13, %12, %cst {dimension_numbers = #tpu.dot_dimension_numbers<[1], [0], [0], [1], [0, 0, 1, 1], [], []>} : vector<2x32xf32>, vector<32x32xf32>, vector<2x32xf32> -> vector<2x32xf32>
    %18 = arith.addf %16, %17 : vector<2x32xf32>
    %19 = math.tanh %18 : vector<2x32xf32>
    %20 = arith.index_cast %c0_i32_16 : i32 to index
    %c0_19 = arith.constant 0 : index
    %c0_20 = arith.constant 0 : index
    %21 = vector.load %arg11[%20, %c0_19, %c0_20] : memref<8x2x32xf32, #tpu.memory_space<vmem>>, vector<1x2x32xf32>
    %22 = vector.shape_cast %21 : vector<1x2x32xf32> to vector<2x32xf32>
    %23 = vector.shape_cast %19 : vector<2x32xf32> to vector<1x2x32xf32>
    tpu.vector_store %arg11[%20, %c0_19, %c0_20], %23 {strides = array<i32>} : memref<8x2x32xf32, #tpu.memory_space<vmem>>, vector<1x2x32xf32>,
    %c1_i32 = arith.constant 1 : i32
    %24 = arith.index_cast %c1_i32 : i32 to index
    %c0_21 = arith.constant 0 : index
    %c0_22 = arith.constant 0 : index
    %25 = vector.load %arg11[%24, %c0_21, %c0_22] : memref<8x2x32xf32, #tpu.memory_space<vmem>>, vector<1x2x32xf32>
    %26 = vector.shape_cast %25 : vector<1x2x32xf32> to vector<2x32xf32>
    %cst_23 = arith.constant dense<0.000000e+00> : vector<2x32xf32>
    %27 = tpu.matmul %19, %12, %cst_23 {dimension_numbers = #tpu.dot_dimension_numbers<[1], [0], [0], [1], [0, 0, 1, 1], [], []>} : vector<2x32xf32>, vector<32x32xf32>, vector<2x32xf32> -> vector<2x32xf32>
    %28 = arith.addf %26, %27 : vector<2x32xf32>
    %29 = math.tanh %28 : vector<2x32xf32>
    %30 = arith.index_cast %c1_i32 : i32 to index
    %c0_24 = arith.constant 0 : index
    %c0_25 = arith.constant 0 : index
    %31 = vector.load %arg11[%30, %c0_24, %c0_25] : memref<8x2x32xf32, #tpu.memory_space<vmem>>, vector<1x2x32xf32>
    %32 = vector.shape_cast %31 : vector<1x2x32xf32> to vector<2x32xf32>
    %33 = vector.shape_cast %29 : vector<2x32xf32> to vector<1x2x32xf32>
    tpu.vector_store %arg11[%30, %c0_24, %c0_25], %33 {strides = array<i32>} : memref<8x2x32xf32, #tpu.memory_space<vmem>>, vector<1x2x32xf32>,
    %c2_i32 = arith.constant 2 : i32
    %34 = arith.index_cast %c2_i32 : i32 to index
    %c0_26 = arith.constant 0 : index
    %c0_27 = arith.constant 0 : index
    %35 = vector.load %arg11[%34, %c0_26, %c0_27] : memref<8x2x32xf32, #tpu.memory_space<vmem>>, vector<1x2x32xf32>
    %36 = vector.shape_cast %35 : vector<1x2x32xf32> to vector<2x32xf32>
    %cst_28 = arith.constant dense<0.000000e+00> : vector<2x32xf32>
    %37 = tpu.matmul %29, %12, %cst_28 {dimension_numbers = #tpu.dot_dimension_numbers<[1], [0], [0], [1], [0, 0, 1, 1], [], []>} : vector<2x32xf32>, vector<32x32xf32>, vector<2x32xf32> -> vector<2x32xf32>
    %38 = arith.addf %36, %37 : vector<2x32xf32>
    %39 = math.tanh %38 : vector<2x32xf32>
    %40 = arith.index_cast %c2_i32 : i32 to index
    %c0_29 = arith.constant 0 : index
    %c0_30 = arith.constant 0 : index
    %41 = vector.load %arg11[%40, %c0_29, %c0_30] : memref<8x2x32xf32, #tpu.memory_space<vmem>>, vector<1x2x32xf32>
    %42 = vector.shape_cast %41 : vector<1x2x32xf32> to vector<2x32xf32>
    %43 = vector.shape_cast %39 : vector<2x32xf32> to vector<1x2x32xf32>
    tpu.vector_store %arg11[%40, %c0_29, %c0_30], %43 {strides = array<i32>} : memref<8x2x32xf32, #tpu.memory_space<vmem>>, vector<1x2x32xf32>,
    %c3_i32 = arith.constant 3 : i32
    %44 = arith.index_cast %c3_i32 : i32 to index
    %c0_31 = arith.constant 0 : index
    %c0_32 = arith.constant 0 : index
    %45 = vector.load %arg11[%44, %c0_31, %c0_32] : memref<8x2x32xf32, #tpu.memory_space<vmem>>, vector<1x2x32xf32>
    %46 = vector.shape_cast %45 : vector<1x2x32xf32> to vector<2x32xf32>
    %cst_33 = arith.constant dense<0.000000e+00> : vector<2x32xf32>
    %47 = tpu.matmul %39, %12, %cst_33 {dimension_numbers = #tpu.dot_dimension_numbers<[1], [0], [0], [1], [0, 0, 1, 1], [], []>} : vector<2x32xf32>, vector<32x32xf32>, vector<2x32xf32> -> vector<2x32xf32>
    %48 = arith.addf %46, %47 : vector<2x32xf32>
    %49 = math.tanh %48 : vector<2x32xf32>
    %50 = arith.index_cast %c3_i32 : i32 to index
    %c0_34 = arith.constant 0 : index
    %c0_35 = arith.constant 0 : index
    %51 = vector.load %arg11[%50, %c0_34, %c0_35] : memref<8x2x32xf32, #tpu.memory_space<vmem>>, vector<1x2x32xf32>
    %52 = vector.shape_cast %51 : vector<1x2x32xf32> to vector<2x32xf32>
    %53 = vector.shape_cast %49 : vector<2x32xf32> to vector<1x2x32xf32>
    tpu.vector_store %arg11[%50, %c0_34, %c0_35], %53 {strides = array<i32>} : memref<8x2x32xf32, #tpu.memory_space<vmem>>, vector<1x2x32xf32>,
    %c4_i32 = arith.constant 4 : i32
    %54 = arith.index_cast %c4_i32 : i32 to index
    %c0_36 = arith.constant 0 : index
    %c0_37 = arith.constant 0 : index
    %55 = vector.load %arg11[%54, %c0_36, %c0_37] : memref<8x2x32xf32, #tpu.memory_space<vmem>>, vector<1x2x32xf32>
    %56 = vector.shape_cast %55 : vector<1x2x32xf32> to vector<2x32xf32>
    %cst_38 = arith.constant dense<0.000000e+00> : vector<2x32xf32>
    %57 = tpu.matmul %49, %12, %cst_38 {dimension_numbers = #tpu.dot_dimension_numbers<[1], [0], [0], [1], [0, 0, 1, 1], [], []>} : vector<2x32xf32>, vector<32x32xf32>, vector<2x32xf32> -> vector<2x32xf32>
    %58 = arith.addf %56, %57 : vector<2x32xf32>
    %59 = math.tanh %58 : vector<2x32xf32>
    %60 = arith.index_cast %c4_i32 : i32 to index
    %c0_39 = arith.constant 0 : index
    %c0_40 = arith.constant 0 : index
    %61 = vector.load %arg11[%60, %c0_39, %c0_40] : memref<8x2x32xf32, #tpu.memory_space<vmem>>, vector<1x2x32xf32>
    %62 = vector.shape_cast %61 : vector<1x2x32xf32> to vector<2x32xf32>
    %63 = vector.shape_cast %59 : vector<2x32xf32> to vector<1x2x32xf32>
    tpu.vector_store %arg11[%60, %c0_39, %c0_40], %63 {strides = array<i32>} : memref<8x2x32xf32, #tpu.memory_space<vmem>>, vector<1x2x32xf32>,
    %c5_i32 = arith.constant 5 : i32
    %64 = arith.index_cast %c5_i32 : i32 to index
    %c0_41 = arith.constant 0 : index
    %c0_42 = arith.constant 0 : index
    %65 = vector.load %arg11[%64, %c0_41, %c0_42] : memref<8x2x32xf32, #tpu.memory_space<vmem>>, vector<1x2x32xf32>
    %66 = vector.shape_cast %65 : vector<1x2x32xf32> to vector<2x32xf32>
    %cst_43 = arith.constant dense<0.000000e+00> : vector<2x32xf32>
    %67 = tpu.matmul %59, %12, %cst_43 {dimension_numbers = #tpu.dot_dimension_numbers<[1], [0], [0], [1], [0, 0, 1, 1], [], []>} : vector<2x32xf32>, vector<32x32xf32>, vector<2x32xf32> -> vector<2x32xf32>
    %68 = arith.addf %66, %67 : vector<2x32xf32>
    %69 = math.tanh %68 : vector<2x32xf32>
    %70 = arith.index_cast %c5_i32 : i32 to index
    %c0_44 = arith.constant 0 : index
    %c0_45 = arith.constant 0 : index
    %71 = vector.load %arg11[%70, %c0_44, %c0_45] : memref<8x2x32xf32, #tpu.memory_space<vmem>>, vector<1x2x32xf32>
    %72 = vector.shape_cast %71 : vector<1x2x32xf32> to vector<2x32xf32>
    %73 = vector.shape_cast %69 : vector<2x32xf32> to vector<1x2x32xf32>
    tpu.vector_store %arg11[%70, %c0_44, %c0_45], %73 {strides = array<i32>} : memref<8x2x32xf32, #tpu.memory_space<vmem>>, vector<1x2x32xf32>,
    %c6_i32 = arith.constant 6 : i32
    %74 = arith.index_cast %c6_i32 : i32 to index
    %c0_46 = arith.constant 0 : index
    %c0_47 = arith.constant 0 : index
    %75 = vector.load %arg11[%74, %c0_46, %c0_47] : memref<8x2x32xf32, #tpu.memory_space<vmem>>, vector<1x2x32xf32>
    %76 = vector.shape_cast %75 : vector<1x2x32xf32> to vector<2x32xf32>
    %cst_48 = arith.constant dense<0.000000e+00> : vector<2x32xf32>
    %77 = tpu.matmul %69, %12, %cst_48 {dimension_numbers = #tpu.dot_dimension_numbers<[1], [0], [0], [1], [0, 0, 1, 1], [], []>} : vector<2x32xf32>, vector<32x32xf32>, vector<2x32xf32> -> vector<2x32xf32>
    %78 = arith.addf %76, %77 : vector<2x32xf32>
    %79 = math.tanh %78 : vector<2x32xf32>
    %80 = arith.index_cast %c6_i32 : i32 to index
    %c0_49 = arith.constant 0 : index
    %c0_50 = arith.constant 0 : index
    %81 = vector.load %arg11[%80, %c0_49, %c0_50] : memref<8x2x32xf32, #tpu.memory_space<vmem>>, vector<1x2x32xf32>
    %82 = vector.shape_cast %81 : vector<1x2x32xf32> to vector<2x32xf32>
    %83 = vector.shape_cast %79 : vector<2x32xf32> to vector<1x2x32xf32>
    tpu.vector_store %arg11[%80, %c0_49, %c0_50], %83 {strides = array<i32>} : memref<8x2x32xf32, #tpu.memory_space<vmem>>, vector<1x2x32xf32>,
    %c7_i32 = arith.constant 7 : i32
    %84 = arith.index_cast %c7_i32 : i32 to index
    %c0_51 = arith.constant 0 : index
    %c0_52 = arith.constant 0 : index
    %85 = vector.load %arg11[%84, %c0_51, %c0_52] : memref<8x2x32xf32, #tpu.memory_space<vmem>>, vector<1x2x32xf32>
    %86 = vector.shape_cast %85 : vector<1x2x32xf32> to vector<2x32xf32>
    %cst_53 = arith.constant dense<0.000000e+00> : vector<2x32xf32>
    %87 = tpu.matmul %79, %12, %cst_53 {dimension_numbers = #tpu.dot_dimension_numbers<[1], [0], [0], [1], [0, 0, 1, 1], [], []>} : vector<2x32xf32>, vector<32x32xf32>, vector<2x32xf32> -> vector<2x32xf32>
    %88 = arith.addf %86, %87 : vector<2x32xf32>
    %89 = math.tanh %88 : vector<2x32xf32>
    %90 = arith.index_cast %c7_i32 : i32 to index
    %c0_54 = arith.constant 0 : index
    %c0_55 = arith.constant 0 : index
    %91 = vector.load %arg11[%90, %c0_54, %c0_55] : memref<8x2x32xf32, #tpu.memory_space<vmem>>, vector<1x2x32xf32>
    %92 = vector.shape_cast %91 : vector<1x2x32xf32> to vector<2x32xf32>
    %93 = vector.shape_cast %89 : vector<2x32xf32> to vector<1x2x32xf32>
    tpu.vector_store %arg11[%90, %c0_54, %c0_55], %93 {strides = array<i32>} : memref<8x2x32xf32, #tpu.memory_space<vmem>>, vector<1x2x32xf32>,
    %c8_i32 = arith.constant 8 : i32
    %c0_56 = arith.constant 0 : index
    %c0_57 = arith.constant 0 : index
    %94 = vector.load %arg10[%c0_56, %c0_57] : memref<2x32xf32, #tpu.memory_space<vmem>>, vector<2x32xf32>
    tpu.vector_store %arg10[%c0_56, %c0_57], %89 {strides = array<i32>} : memref<2x32xf32, #tpu.memory_space<vmem>>, vector<2x32xf32>,
    %c0_58 = arith.constant 0 : index
    %c0_59 = arith.constant 0 : index
    %c0_60 = arith.constant 0 : index
    %95 = vector.load %arg11[%c0_58, %c0_59, %c0_60] : memref<8x2x32xf32, #tpu.memory_space<vmem>>, vector<8x2x32xf32>
    %c0_61 = arith.constant 0 : index
    %c0_62 = arith.constant 0 : index
    %c0_63 = arith.constant 0 : index
    %96 = vector.load %arg6[%c0_61, %c0_62, %c0_63] : memref<1x1x32xf32, #tpu.memory_space<vmem>>, vector<1x1x32xf32>
    %97 = vector.broadcast %96 : vector<1x1x32xf32> to vector<8x2x32xf32>
    %98 = arith.mulf %95, %97 : vector<8x2x32xf32>
    %cst_64 = arith.constant dense<0.000000e+00> : vector<8x2xf32>
    %99 = vector.multi_reduction <add>, %98, %cst_64 [2] : vector<8x2x32xf32> to vector<8x2xf32>
    %c0_65 = arith.constant 0 : index
    %c0_66 = arith.constant 0 : index
    %100 = vector.load %arg7[%c0_65, %c0_66] : memref<1x1xf32, #tpu.memory_space<vmem>>, vector<1x1xf32>
    %101 = vector.broadcast %100 : vector<1x1xf32> to vector<8x2xf32>
    %102 = arith.addf %99, %101 : vector<8x2xf32>
    %c0_67 = arith.constant 0 : index
    %c0_68 = arith.constant 0 : index
    %103 = vector.load %arg8[%c0_67, %c0_68] : memref<8x2xf32, #tpu.memory_space<vmem>>, vector<8x2xf32>
    tpu.vector_store %arg8[%c0_67, %c0_68], %102 {strides = array<i32>} : memref<8x2xf32, #tpu.memory_space<vmem>>, vector<8x2xf32>,
    %c0_i32_69 = arith.constant 0 : i32
    %104 = arith.cmpi eq, %arg0, %c0_i32_69 : i32
    %105 = arith.extui %104 : i1 to i32
    %c0_i32_70 = arith.constant 0 : i32
    %106 = arith.cmpi ne, %105, %c0_i32_70 : i32
    scf.if %106 {
      %c0_71 = arith.constant 0 : index
      %c0_72 = arith.constant 0 : index
      %107 = vector.load %arg9[%c0_71, %c0_72] : memref<2x32xf32, #tpu.memory_space<vmem>>, vector<2x32xf32>
      tpu.vector_store %arg9[%c0_71, %c0_72], %89 {strides = array<i32>} : memref<2x32xf32, #tpu.memory_space<vmem>>, vector<2x32xf32>,
    } else {
    }
    return
  }
  func.func @transform_0(%arg0: i32) -> (i32, i32, i32) {
    %c0_i32 = arith.constant 0 : i32
    %c0_i32_0 = arith.constant 0 : i32
    %c0_i32_1 = arith.constant 0 : i32
    return %arg0, %c0_i32, %c0_i32_0 : i32, i32, i32
  }
  func.func @transform_1(%arg0: i32) -> (i32, i32) {
    %c0_i32 = arith.constant 0 : i32
    %c0_i32_0 = arith.constant 0 : i32
    %c0_i32_1 = arith.constant 0 : i32
    return %c0_i32, %c0_i32_0 : i32, i32
  }
  func.func @transform_2(%arg0: i32) -> (i32, i32, i32) {
    %c0_i32 = arith.constant 0 : i32
    %c0_i32_0 = arith.constant 0 : i32
    %c0_i32_1 = arith.constant 0 : i32
    %c0_i32_2 = arith.constant 0 : i32
    return %c0_i32, %c0_i32_0, %c0_i32_1 : i32, i32, i32
  }
  func.func @transform_3(%arg0: i32) -> (i32, i32, i32) {
    %c0_i32 = arith.constant 0 : i32
    %c0_i32_0 = arith.constant 0 : i32
    %c0_i32_1 = arith.constant 0 : i32
    %c0_i32_2 = arith.constant 0 : i32
    return %c0_i32, %c0_i32_0, %c0_i32_1 : i32, i32, i32
  }
  func.func @transform_4(%arg0: i32) -> (i32, i32) {
    %c0_i32 = arith.constant 0 : i32
    %c0_i32_0 = arith.constant 0 : i32
    %c0_i32_1 = arith.constant 0 : i32
    return %c0_i32, %c0_i32_0 : i32, i32
  }
  func.func @transform_5(%arg0: i32) -> (i32, i32, i32) {
    %c0_i32 = arith.constant 0 : i32
    %c0_i32_0 = arith.constant 0 : i32
    %c0_i32_1 = arith.constant 0 : i32
    %c0_i32_2 = arith.constant 0 : i32
    return %c0_i32, %c0_i32_0, %c0_i32_1 : i32, i32, i32
  }
  func.func @transform_6(%arg0: i32) -> (i32, i32) {
    %c0_i32 = arith.constant 0 : i32
    %c0_i32_0 = arith.constant 0 : i32
    %c0_i32_1 = arith.constant 0 : i32
    return %c0_i32, %c0_i32_0 : i32, i32
  }
  func.func @transform_7(%arg0: i32) -> (i32, i32) {
    %c0_i32 = arith.constant 0 : i32
    %c0_i32_0 = arith.constant 0 : i32
    return %arg0, %c0_i32 : i32, i32
  }
  func.func @transform_8(%arg0: i32) -> (i32, i32) {
    %c0_i32 = arith.constant 0 : i32
    %c0_i32_0 = arith.constant 0 : i32
    %c0_i32_1 = arith.constant 0 : i32
    return %c0_i32, %c0_i32_0 : i32, i32
  }
}

</mosaic_0001>

<llo_original>
// kernel: rnn_forward.1
$region0: #{rnn_forward.1}
  #allocation0 [shape = 'u32[]', space=smem, size = 0x4, offset = 0x4, fixed_abs, tag = 'smem constant byte address 0x4 - core index']
  #allocation1 [shape = 'u32[144,128]{1,0:T(1,128)}', space=vmem, size = 0x12000, scoped, tag = 'internal scratch']
  #allocation2 [shape = 'f32[2,32]{1,0:T(2,128)}', space=vmem, size = 0x400, scoped, tag = 'scratch operand']
  #allocation3 [shape = 'f32[8,2,32]{2,1,0:T(2,128)}', space=vmem, size = 0x2000, scoped, tag = 'scratch operand']
  #allocation4 [shape = 'f32[1,1]{1,0:T(1,128)S(1)}', space=vmem, size = 0x200, scoped, tag = 'scoped memory for rnn_forward.1']
  %s0 = inlined_call_operand.vmem [shape: f32[8,2,1], index: 0, kind: input, shape index: {}]
  %s1 = inlined_call_operand.vmem [shape: f32[2,32], index: 1, kind: input, shape index: {}]
  %s2 = inlined_call_operand.vmem [shape: f32[1,1,32], index: 2, kind: input, shape index: {}]
  %s3 = inlined_call_operand.vmem [shape: f32[1,1,32], index: 3, kind: input, shape index: {}]
  %s4 = inlined_call_operand.vmem [shape: f32[32,32], index: 4, kind: input, shape index: {}]
  %s5 = inlined_call_operand.vmem [shape: f32[1,1,32], index: 5, kind: input, shape index: {}]
  %s6 = inlined_call_operand.<no memory space> [shape: f32[1,1], index: 6, kind: input, shape index: {}]
  %s7 = inlined_call_operand.vmem [shape: f32[8,2], index: 7, kind: output, shape index: {0}]
  %s8 = inlined_call_operand.hbm [shape: f32[2,32], index: 8, kind: output, shape index: {1}]
  %9 = xla_tuple %s7, %s8
  %s10 = sld [smem:[#allocation0]]
  $region54: #{rnn_forward.1} parent=0
    _
  %s12 = ssub.s32 1, %s10
  %s13 = scalar_select 0, %s12, %s10
  %v14 = vstv %s6
  %15 = vst [vmem:[#allocation4] sm:$0x1] %v14
  $region1: #{rnn_forward.1} parent=0
    #allocation5 [shape = 'u8[1024]{0}', space=vmem, size = 0x400, scoped, tag = 'output window, operand 1, single buffered']
    #allocation6 [shape = 's32[1]{0}', space=sflag, size = 0x4, scoped, tag = 'scoped memory for rnn_forward.1']
    %16 = vsyncpa [#allocation6], 0
    // Predicated region
    $region2: #{rnn_forward.1} parent=1 // pred_check
      _
    $region3: #{rnn_forward.1} parent=1 // pred_check_branch
      %18 = sbr.rel (0) target = $region5
    $region4: #{rnn_forward.1} parent=1 // pred_region
      _
    $region5: #{rnn_forward.1} parent=1 // pred_fallthru
      _
    // Predicated region
    $region6: #{rnn_forward.1} parent=1 // pred_check
      _
    $region7: #{rnn_forward.1} parent=1 // pred_check_branch
      %20 = sbr.rel (0) target = $region9
    $region8: #{rnn_forward.1} parent=1 // pred_region
      _
    $region9: #{rnn_forward.1} parent=1 // pred_fallthru
      _
    // Predicated region
    $region10: #{rnn_forward.1} parent=1 // pred_check
      _
    $region11: #{rnn_forward.1} parent=1 // pred_check_branch
      %22 = sbr.rel (0) target = $region13
    $region12: #{rnn_forward.1} parent=1 // pred_region
      _
    $region13: #{rnn_forward.1} parent=1 // pred_fallthru
      _
    // Predicated region
    $region14: #{rnn_forward.1} parent=1 // pred_check
      _
    $region15: #{rnn_forward.1} parent=1 // pred_check_branch
      %24 = sbr.rel (0) target = $region17
    $region16: #{rnn_forward.1} parent=1 // pred_region
      _
    $region17: #{rnn_forward.1} parent=1 // pred_fallthru
      _
    // Predicated region
    $region18: #{rnn_forward.1} parent=1 // pred_check
      _
    $region19: #{rnn_forward.1} parent=1 // pred_check_branch
      %26 = sbr.rel (0) target = $region21
    $region20: #{rnn_forward.1} parent=1 // pred_region
      _
    $region21: #{rnn_forward.1} parent=1 // pred_fallthru
      _
    // Predicated region
    $region22: #{rnn_forward.1} parent=1 // pred_check
      _
    $region23: #{rnn_forward.1} parent=1 // pred_check_branch
      %28 = sbr.rel (0) target = $region25
    $region24: #{rnn_forward.1} parent=1 // pred_region
      _
    $region25: #{rnn_forward.1} parent=1 // pred_fallthru
      _
    // Predicated region
    $region26: #{rnn_forward.1} parent=1 // pred_check
      _
    $region27: #{rnn_forward.1} parent=1 // pred_check_branch
      %30 = sbr.rel (0) target = $region29
    $region28: #{rnn_forward.1} parent=1 // pred_region
      _
    $region29: #{rnn_forward.1} parent=1 // pred_fallthru
      _
    %p31 = scmp.eq.s32.totalorder 0, 0
    // Predicated region
    $region30: #{rnn_forward.1} parent=1 // pred_check
      %p32 = pneg %p31
    $region31: #{rnn_forward.1} parent=1 // pred_check_branch
      %34 = sbr.rel (%p32) target = $region33
    $region32: #{rnn_forward.1} parent=1 // pred_region
      %v35 = vld [vmem:[%s1] sm:$0x3]
      %vm36 = vcmask 254976
      %37 = vst.msk [vmem:[#allocation2] sm:$0x3] %vm36, %v35
    $region33: #{rnn_forward.1} parent=1 // pred_fallthru
      _
    %v38 = vld [vmem:[%s0] sm:$0x3]
    %v39 = vld [vmem:[%s0 + $0x2] sm:$0x3]
    %v40 = vld [vmem:[%s0 + $0x4] sm:$0x3]
    %v41 = vld [vmem:[%s0 + $0x6] sm:$0x3]
    %v42 = vld [vmem:[%s0 + $0x8] sm:$0x3]
    %v43 = vld [vmem:[%s0 + $0xa] sm:$0x3]
    %v44 = vld [vmem:[%s0 + $0xc] sm:$0x3]
    %v45 = vld [vmem:[%s0 + $0xe] sm:$0x3]
    %v46 = vld [vmem:[%s2] sm:$0x1]
    %48 = vset.pattern.permute.xlu0 0
    %49 = vperm.xlu0 %48, %v38
    %v50 = vpop.permute.xlu0 %49
    %53 = vset.pattern.permute.xlu0 0
    %54 = vperm.xlu0 %53, %v39
    %v55 = vpop.permute.xlu0 %54
    %58 = vset.pattern.permute.xlu0 0
    %59 = vperm.xlu0 %58, %v40
    %v60 = vpop.permute.xlu0 %59
    %63 = vset.pattern.permute.xlu0 0
    %64 = vperm.xlu0 %63, %v41
    %v65 = vpop.permute.xlu0 %64
    %68 = vset.pattern.permute.xlu0 0
    %69 = vperm.xlu0 %68, %v42
    %v70 = vpop.permute.xlu0 %69
    %73 = vset.pattern.permute.xlu0 0
    %74 = vperm.xlu0 %73, %v43
    %v75 = vpop.permute.xlu0 %74
    %78 = vset.pattern.permute.xlu0 0
    %79 = vperm.xlu0 %78, %v44
    %v80 = vpop.permute.xlu0 %79
    %83 = vset.pattern.permute.xlu0 0
    %84 = vperm.xlu0 %83, %v45
    %v85 = vpop.permute.xlu0 %84
    %v88 = vlaneseq
    %v89 = vshrl.u32 %v88, 7
    %v90 = vsub.s32 0, %v89
    %v91 = vrot.slane %v46, %v90
    %v93 = vmul.f32 %v50, %v91
    %v94 = vmul.f32 %v55, %v91
    %v95 = vmul.f32 %v60, %v91
    %v96 = vmul.f32 %v65, %v91
    %v97 = vmul.f32 %v70, %v91
    %v98 = vmul.f32 %v75, %v91
    %v99 = vmul.f32 %v80, %v91
    %v100 = vmul.f32 %v85, %v91
    %v101 = vld [vmem:[%s3] sm:$0x1]
    %v103 = vlaneseq
    %v104 = vshrl.u32 %v103, 7
    %v105 = vsub.s32 0, %v104
    %v106 = vrot.slane %v101, %v105
    %v108 = vadd.f32 %v93, %v106
    %v109 = vadd.f32 %v94, %v106
    %v110 = vadd.f32 %v95, %v106
    %v111 = vadd.f32 %v96, %v106
    %v112 = vadd.f32 %v97, %v106
    %v113 = vadd.f32 %v98, %v106
    %v114 = vadd.f32 %v99, %v106
    %v115 = vadd.f32 %v100, %v106
    %vm116 = vcmask 254976
    %117 = vst.msk [vmem:[#allocation3] sm:$0x3] %vm116, %v108
    %118 = vst.msk [vmem:[#allocation3 + $0x2] sm:$0x3] %vm116, %v109
    %119 = vst.msk [vmem:[#allocation3 + $0x4] sm:$0x3] %vm116, %v110
    %120 = vst.msk [vmem:[#allocation3 + $0x6] sm:$0x3] %vm116, %v111
    %121 = vst.msk [vmem:[#allocation3 + $0x8] sm:$0x3] %vm116, %v112
    %122 = vst.msk [vmem:[#allocation3 + $0xa] sm:$0x3] %vm116, %v113
    %123 = vst.msk [vmem:[#allocation3 + $0xc] sm:$0x3] %vm116, %v114
    %124 = vst.msk [vmem:[#allocation3 + $0xe] sm:$0x3] %vm116, %v115
    %v125 = vld [vmem:[%s4] sm:$0xff]
    %v126 = vld [vmem:[%s4 + $0x8] sm:$0xff]
    %v127 = vld [vmem:[%s4 + $0x10] sm:$0xff]
    %v128 = vld [vmem:[%s4 + $0x18] sm:$0xff]
    %v129 = vld [vmem:[#allocation2] sm:$0x3]
    %v130 = vld [vmem:[#allocation3] sm:$0x3]
    %vm131 = vcmask 261120
    %v133 = vsel %vm131, %v129, 0
    %135 = vmatprep.subr.mxu0 0.0
    %136 = vmatpush1.msra.mxu0 %v125
    %137 = vmatprep.subr.mxu0 0.0
    %138 = vmatpush1.msra.mxu0 %v126
    %139 = vmatprep.subr.mxu0 0.0
    %140 = vmatpush1.msra.mxu0 %v127
    %141 = vmatprep.subr.mxu0 0.0
    %142 = vmatpush1.msra.mxu0 %v128
    %143 = vmatprep.subr.mxu0 0.0
    %144 = vmatpush1.msra.mxu0 0.0
    %145 = vmatprep.subr.mxu0 0.0
    %146 = vmatpush1.msra.mxu0 0.0
    %147 = vmatprep.subr.mxu0 0.0
    %148 = vmatpush1.msra.mxu0 0.0
    %149 = vmatprep.subr.mxu0 0.0
    %150 = vmatpush1.msra.mxu0 0.0
    %151 = vmatprep.subr.mxu0 0.0
    %152 = vmatpush1.msra.mxu0 0.0
    %153 = vmatprep.subr.mxu0 0.0
    %154 = vmatpush1.msra.mxu0 0.0
    %155 = vmatprep.subr.mxu0 0.0
    %156 = vmatpush1.msra.mxu0 0.0
    %157 = vmatprep.subr.mxu0 0.0
    %158 = vmatpush1.msra.mxu0 0.0
    %159 = vmatprep.subr.mxu0 0.0
    %160 = vmatpush1.msra.mxu0 0.0
    %161 = vmatprep.subr.mxu0 0.0
    %162 = vmatpush1.msra.mxu0 0.0
    %163 = vmatprep.subr.mxu0 0.0
    %164 = vmatpush1.msra.mxu0 0.0
    %165 = vmatprep.subr.mxu0 0.0
    %166 = vmatpush1.msra.mxu0 0.0
    %167 = vmatprep.subr.mxu0 0.0
    %168 = vmatpush1.msra.mxu0 0.0
    %169 = vmatprep.subr.mxu0 0.0
    %170 = vmatpush1.msra.mxu0 0.0
    %171 = vmatprep.subr.mxu0 0.0
    %172 = vmatpush1.msra.mxu0 0.0
    %173 = vmatprep.subr.mxu0 0.0
    %174 = vmatpush1.msra.mxu0 0.0
    %175 = vmatprep.subr.mxu0 0.0
    %176 = vmatpush1.msra.mxu0 0.0
    %177 = vmatprep.subr.mxu0 0.0
    %178 = vmatpush1.msra.mxu0 0.0
    %179 = vmatprep.subr.mxu0 0.0
    %180 = vmatpush1.msra.mxu0 0.0
    %181 = vmatprep.subr.mxu0 0.0
    %182 = vmatpush1.msra.mxu0 0.0
    %183 = vmatprep.subr.mxu0 0.0
    %184 = vmatpush1.msra.mxu0 0.0
    %185 = vmatprep.subr.mxu0 0.0
    %186 = vmatpush1.msra.mxu0 0.0
    %187 = vmatprep.subr.mxu0 0.0
    %188 = vmatpush1.msra.mxu0 0.0
    %189 = vmatprep.subr.mxu0 0.0
    %190 = vmatpush1.msra.mxu0 0.0
    %191 = vmatprep.subr.mxu0 0.0
    %192 = vmatpush1.msra.mxu0 0.0
    %193 = vmatprep.subr.mxu0 0.0
    %194 = vmatpush1.msra.mxu0 0.0
    %195 = vmatprep.subr.mxu0 0.0
    %196 = vmatpush1.msra.mxu0 0.0
    %197 = vmatprep.subr.mxu0 0.0
    %198 = vmatpush1.msra.mxu0 0.0
    %199 = vmatprep.mubr.f32.mxu0 0.0
    %200 = vmatmul.mubr.f32.gmra.mrb[0].mxu0 %v133
    %v201 = vpop.f32.mrb[0].mxu0
    %v202 = vadd.f32 0.0, %v201
    %v203 = vpop.f32.mrb[0].mxu0
    %204 = vdwg.mxu0
    %v205 = vadd.f32 %v130, %v202
    %v206 = vtanh.pop %v205
    %207 = vst.msk [vmem:[#allocation3] sm:$0x3] %vm116, %v206
    %s208 = scalar_lea.vmem [#allocation3], 2
    %v209 = vld [vmem:[%s208] sm:$0x3]
    %v211 = vsel %vm131, %v206, 0
    %213 = vmatprep.subr.mxu0 0.0
    %214 = vmatpush1.msra.mxu0 %v125
    %215 = vmatprep.subr.mxu0 0.0
    %216 = vmatpush1.msra.mxu0 %v126
    %217 = vmatprep.subr.mxu0 0.0
    %218 = vmatpush1.msra.mxu0 %v127
    %219 = vmatprep.subr.mxu0 0.0
    %220 = vmatpush1.msra.mxu0 %v128
    %221 = vmatprep.subr.mxu0 0.0
    %222 = vmatpush1.msra.mxu0 0.0
    %223 = vmatprep.subr.mxu0 0.0
    %224 = vmatpush1.msra.mxu0 0.0
    %225 = vmatprep.subr.mxu0 0.0
    %226 = vmatpush1.msra.mxu0 0.0
    %227 = vmatprep.subr.mxu0 0.0
    %228 = vmatpush1.msra.mxu0 0.0
    %229 = vmatprep.subr.mxu0 0.0
    %230 = vmatpush1.msra.mxu0 0.0
    %231 = vmatprep.subr.mxu0 0.0
    %232 = vmatpush1.msra.mxu0 0.0
    %233 = vmatprep.subr.mxu0 0.0
    %234 = vmatpush1.msra.mxu0 0.0
    %235 = vmatprep.subr.mxu0 0.0
    %236 = vmatpush1.msra.mxu0 0.0
    %237 = vmatprep.subr.mxu0 0.0
    %238 = vmatpush1.msra.mxu0 0.0
    %239 = vmatprep.subr.mxu0 0.0
    %240 = vmatpush1.msra.mxu0 0.0
    %241 = vmatprep.subr.mxu0 0.0
    %242 = vmatpush1.msra.mxu0 0.0
    %243 = vmatprep.subr.mxu0 0.0
    %244 = vmatpush1.msra.mxu0 0.0
    %245 = vmatprep.subr.mxu0 0.0
    %246 = vmatpush1.msra.mxu0 0.0
    %247 = vmatprep.subr.mxu0 0.0
    %248 = vmatpush1.msra.mxu0 0.0
    %249 = vmatprep.subr.mxu0 0.0
    %250 = vmatpush1.msra.mxu0 0.0
    %251 = vmatprep.subr.mxu0 0.0
    %252 = vmatpush1.msra.mxu0 0.0
    %253 = vmatprep.subr.mxu0 0.0
    %254 = vmatpush1.msra.mxu0 0.0
    %255 = vmatprep.subr.mxu0 0.0
    %256 = vmatpush1.msra.mxu0 0.0
    %257 = vmatprep.subr.mxu0 0.0
    %258 = vmatpush1.msra.mxu0 0.0
    %259 = vmatprep.subr.mxu0 0.0
    %260 = vmatpush1.msra.mxu0 0.0
    %261 = vmatprep.subr.mxu0 0.0
    %262 = vmatpush1.msra.mxu0 0.0
    %263 = vmatprep.subr.mxu0 0.0
    %264 = vmatpush1.msra.mxu0 0.0
    %265 = vmatprep.subr.mxu0 0.0
    %266 = vmatpush1.msra.mxu0 0.0
    %267 = vmatprep.subr.mxu0 0.0
    %268 = vmatpush1.msra.mxu0 0.0
    %269 = vmatprep.subr.mxu0 0.0
    %270 = vmatpush1.msra.mxu0 0.0
    %271 = vmatprep.subr.mxu0 0.0
    %272 = vmatpush1.msra.mxu0 0.0
    %273 = vmatprep.subr.mxu0 0.0
    %274 = vmatpush1.msra.mxu0 0.0
    %275 = vmatprep.subr.mxu0 0.0
    %276 = vmatpush1.msra.mxu0 0.0
    %277 = vmatprep.mubr.f32.mxu0 0.0
    %278 = vmatmul.mubr.f32.gmra.mrb[0].mxu0 %v211
    %v279 = vpop.f32.mrb[0].mxu0
    %v280 = vadd.f32 0.0, %v279
    %v281 = vpop.f32.mrb[0].mxu0
    %282 = vdwg.mxu0
    %v283 = vadd.f32 %v209, %v280
    %v284 = vtanh.pop %v283
    %285 = vst.msk [vmem:[%s208] sm:$0x3] %vm116, %v284
    %s286 = scalar_lea.vmem [#allocation3], 4
    %v287 = vld [vmem:[%s286] sm:$0x3]
    %v289 = vsel %vm131, %v284, 0
    %291 = vmatprep.subr.mxu0 0.0
    %292 = vmatpush1.msra.mxu0 %v125
    %293 = vmatprep.subr.mxu0 0.0
    %294 = vmatpush1.msra.mxu0 %v126
    %295 = vmatprep.subr.mxu0 0.0
    %296 = vmatpush1.msra.mxu0 %v127
    %297 = vmatprep.subr.mxu0 0.0
    %298 = vmatpush1.msra.mxu0 %v128
    %299 = vmatprep.subr.mxu0 0.0
    %300 = vmatpush1.msra.mxu0 0.0
    %301 = vmatprep.subr.mxu0 0.0
    %302 = vmatpush1.msra.mxu0 0.0
    %303 = vmatprep.subr.mxu0 0.0
    %304 = vmatpush1.msra.mxu0 0.0
    %305 = vmatprep.subr.mxu0 0.0
    %306 = vmatpush1.msra.mxu0 0.0
    %307 = vmatprep.subr.mxu0 0.0
    %308 = vmatpush1.msra.mxu0 0.0
    %309 = vmatprep.subr.mxu0 0.0
    %310 = vmatpush1.msra.mxu0 0.0
    %311 = vmatprep.subr.mxu0 0.0
    %312 = vmatpush1.msra.mxu0 0.0
    %313 = vmatprep.subr.mxu0 0.0
    %314 = vmatpush1.msra.mxu0 0.0
    %315 = vmatprep.subr.mxu0 0.0
    %316 = vmatpush1.msra.mxu0 0.0
    %317 = vmatprep.subr.mxu0 0.0
    %318 = vmatpush1.msra.mxu0 0.0
    %319 = vmatprep.subr.mxu0 0.0
    %320 = vmatpush1.msra.mxu0 0.0
    %321 = vmatprep.subr.mxu0 0.0
    %322 = vmatpush1.msra.mxu0 0.0
    %323 = vmatprep.subr.mxu0 0.0
    %324 = vmatpush1.msra.mxu0 0.0
    %325 = vmatprep.subr.mxu0 0.0
    %326 = vmatpush1.msra.mxu0 0.0
    %327 = vmatprep.subr.mxu0 0.0
    %328 = vmatpush1.msra.mxu0 0.0
    %329 = vmatprep.subr.mxu0 0.0
    %330 = vmatpush1.msra.mxu0 0.0
    %331 = vmatprep.subr.mxu0 0.0
    %332 = vmatpush1.msra.mxu0 0.0
    %333 = vmatprep.subr.mxu0 0.0
    %334 = vmatpush1.msra.mxu0 0.0
    %335 = vmatprep.subr.mxu0 0.0
    %336 = vmatpush1.msra.mxu0 0.0
    %337 = vmatprep.subr.mxu0 0.0
    %338 = vmatpush1.msra.mxu0 0.0
    %339 = vmatprep.subr.mxu0 0.0
    %340 = vmatpush1.msra.mxu0 0.0
    %341 = vmatprep.subr.mxu0 0.0
    %342 = vmatpush1.msra.mxu0 0.0
    %343 = vmatprep.subr.mxu0 0.0
    %344 = vmatpush1.msra.mxu0 0.0
    %345 = vmatprep.subr.mxu0 0.0
    %346 = vmatpush1.msra.mxu0 0.0
    %347 = vmatprep.subr.mxu0 0.0
    %348 = vmatpush1.msra.mxu0 0.0
    %349 = vmatprep.subr.mxu0 0.0
    %350 = vmatpush1.msra.mxu0 0.0
    %351 = vmatprep.subr.mxu0 0.0
    %352 = vmatpush1.msra.mxu0 0.0
    %353 = vmatprep.subr.mxu0 0.0
    %354 = vmatpush1.msra.mxu0 0.0
    %355 = vmatprep.mubr.f32.mxu0 0.0
    %356 = vmatmul.mubr.f32.gmra.mrb[0].mxu0 %v289
    %v357 = vpop.f32.mrb[0].mxu0
    %v358 = vadd.f32 0.0, %v357
    %v359 = vpop.f32.mrb[0].mxu0
    %360 = vdwg.mxu0
    %v361 = vadd.f32 %v287, %v358
    %v362 = vtanh.pop %v361
    %363 = vst.msk [vmem:[%s286] sm:$0x3] %vm116, %v362
    %s364 = scalar_lea.vmem [#allocation3], 6
    %v365 = vld [vmem:[%s364] sm:$0x3]
    %v367 = vsel %vm131, %v362, 0
    %369 = vmatprep.subr.mxu0 0.0
    %370 = vmatpush1.msra.mxu0 %v125
    %371 = vmatprep.subr.mxu0 0.0
    %372 = vmatpush1.msra.mxu0 %v126
    %373 = vmatprep.subr.mxu0 0.0
    %374 = vmatpush1.msra.mxu0 %v127
    %375 = vmatprep.subr.mxu0 0.0
    %376 = vmatpush1.msra.mxu0 %v128
    %377 = vmatprep.subr.mxu0 0.0
    %378 = vmatpush1.msra.mxu0 0.0
    %379 = vmatprep.subr.mxu0 0.0
    %380 = vmatpush1.msra.mxu0 0.0
    %381 = vmatprep.subr.mxu0 0.0
    %382 = vmatpush1.msra.mxu0 0.0
    %383 = vmatprep.subr.mxu0 0.0
    %384 = vmatpush1.msra.mxu0 0.0
    %385 = vmatprep.subr.mxu0 0.0
    %386 = vmatpush1.msra.mxu0 0.0
    %387 = vmatprep.subr.mxu0 0.0
    %388 = vmatpush1.msra.mxu0 0.0
    %389 = vmatprep.subr.mxu0 0.0
    %390 = vmatpush1.msra.mxu0 0.0
    %391 = vmatprep.subr.mxu0 0.0
    %392 = vmatpush1.msra.mxu0 0.0
    %393 = vmatprep.subr.mxu0 0.0
    %394 = vmatpush1.msra.mxu0 0.0
    %395 = vmatprep.subr.mxu0 0.0
    %396 = vmatpush1.msra.mxu0 0.0
    %397 = vmatprep.subr.mxu0 0.0
    %398 = vmatpush1.msra.mxu0 0.0
    %399 = vmatprep.subr.mxu0 0.0
    %400 = vmatpush1.msra.mxu0 0.0
    %401 = vmatprep.subr.mxu0 0.0
    %402 = vmatpush1.msra.mxu0 0.0
    %403 = vmatprep.subr.mxu0 0.0
    %404 = vmatpush1.msra.mxu0 0.0
    %405 = vmatprep.subr.mxu0 0.0
    %406 = vmatpush1.msra.mxu0 0.0
    %407 = vmatprep.subr.mxu0 0.0
    %408 = vmatpush1.msra.mxu0 0.0
    %409 = vmatprep.subr.mxu0 0.0
    %410 = vmatpush1.msra.mxu0 0.0
    %411 = vmatprep.subr.mxu0 0.0
    %412 = vmatpush1.msra.mxu0 0.0
    %413 = vmatprep.subr.mxu0 0.0
    %414 = vmatpush1.msra.mxu0 0.0
    %415 = vmatprep.subr.mxu0 0.0
    %416 = vmatpush1.msra.mxu0 0.0
    %417 = vmatprep.subr.mxu0 0.0
    %418 = vmatpush1.msra.mxu0 0.0
    %419 = vmatprep.subr.mxu0 0.0
    %420 = vmatpush1.msra.mxu0 0.0
    %421 = vmatprep.subr.mxu0 0.0
    %422 = vmatpush1.msra.mxu0 0.0
    %423 = vmatprep.subr.mxu0 0.0
    %424 = vmatpush1.msra.mxu0 0.0
    %425 = vmatprep.subr.mxu0 0.0
    %426 = vmatpush1.msra.mxu0 0.0
    %427 = vmatprep.subr.mxu0 0.0
    %428 = vmatpush1.msra.mxu0 0.0
    %429 = vmatprep.subr.mxu0 0.0
    %430 = vmatpush1.msra.mxu0 0.0
    %431 = vmatprep.subr.mxu0 0.0
    %432 = vmatpush1.msra.mxu0 0.0
    %433 = vmatprep.mubr.f32.mxu0 0.0
    %434 = vmatmul.mubr.f32.gmra.mrb[0].mxu0 %v367
    %v435 = vpop.f32.mrb[0].mxu0
    %v436 = vadd.f32 0.0, %v435
    %v437 = vpop.f32.mrb[0].mxu0
    %438 = vdwg.mxu0
    %v439 = vadd.f32 %v365, %v436
    %v440 = vtanh.pop %v439
    %441 = vst.msk [vmem:[%s364] sm:$0x3] %vm116, %v440
    %s442 = scalar_lea.vmem [#allocation3], 8
    %v443 = vld [vmem:[%s442] sm:$0x3]
    %v445 = vsel %vm131, %v440, 0
    %447 = vmatprep.subr.mxu0 0.0
    %448 = vmatpush1.msra.mxu0 %v125
    %449 = vmatprep.subr.mxu0 0.0
    %450 = vmatpush1.msra.mxu0 %v126
    %451 = vmatprep.subr.mxu0 0.0
    %452 = vmatpush1.msra.mxu0 %v127
    %453 = vmatprep.subr.mxu0 0.0
    %454 = vmatpush1.msra.mxu0 %v128
    %455 = vmatprep.subr.mxu0 0.0
    %456 = vmatpush1.msra.mxu0 0.0
    %457 = vmatprep.subr.mxu0 0.0
    %458 = vmatpush1.msra.mxu0 0.0
    %459 = vmatprep.subr.mxu0 0.0
    %460 = vmatpush1.msra.mxu0 0.0
    %461 = vmatprep.subr.mxu0 0.0
    %462 = vmatpush1.msra.mxu0 0.0
    %463 = vmatprep.subr.mxu0 0.0
    %464 = vmatpush1.msra.mxu0 0.0
    %465 = vmatprep.subr.mxu0 0.0
    %466 = vmatpush1.msra.mxu0 0.0
    %467 = vmatprep.subr.mxu0 0.0
    %468 = vmatpush1.msra.mxu0 0.0
    %469 = vmatprep.subr.mxu0 0.0
    %470 = vmatpush1.msra.mxu0 0.0
    %471 = vmatprep.subr.mxu0 0.0
    %472 = vmatpush1.msra.mxu0 0.0
    %473 = vmatprep.subr.mxu0 0.0
    %474 = vmatpush1.msra.mxu0 0.0
    %475 = vmatprep.subr.mxu0 0.0
    %476 = vmatpush1.msra.mxu0 0.0
    %477 = vmatprep.subr.mxu0 0.0
    %478 = vmatpush1.msra.mxu0 0.0
    %479 = vmatprep.subr.mxu0 0.0
    %480 = vmatpush1.msra.mxu0 0.0
    %481 = vmatprep.subr.mxu0 0.0
    %482 = vmatpush1.msra.mxu0 0.0
    %483 = vmatprep.subr.mxu0 0.0
    %484 = vmatpush1.msra.mxu0 0.0
    %485 = vmatprep.subr.mxu0 0.0
    %486 = vmatpush1.msra.mxu0 0.0
    %487 = vmatprep.subr.mxu0 0.0
    %488 = vmatpush1.msra.mxu0 0.0
    %489 = vmatprep.subr.mxu0 0.0
    %490 = vmatpush1.msra.mxu0 0.0
    %491 = vmatprep.subr.mxu0 0.0
    %492 = vmatpush1.msra.mxu0 0.0
    %493 = vmatprep.subr.mxu0 0.0
    %494 = vmatpush1.msra.mxu0 0.0
    %495 = vmatprep.subr.mxu0 0.0
    %496 = vmatpush1.msra.mxu0 0.0
    %497 = vmatprep.subr.mxu0 0.0
    %498 = vmatpush1.msra.mxu0 0.0
    %499 = vmatprep.subr.mxu0 0.0
    %500 = vmatpush1.msra.mxu0 0.0
    %501 = vmatprep.subr.mxu0 0.0
    %502 = vmatpush1.msra.mxu0 0.0
    %503 = vmatprep.subr.mxu0 0.0
    %504 = vmatpush1.msra.mxu0 0.0
    %505 = vmatprep.subr.mxu0 0.0
    %506 = vmatpush1.msra.mxu0 0.0
    %507 = vmatprep.subr.mxu0 0.0
    %508 = vmatpush1.msra.mxu0 0.0
    %509 = vmatprep.subr.mxu0 0.0
    %510 = vmatpush1.msra.mxu0 0.0
    %511 = vmatprep.mubr.f32.mxu0 0.0
    %512 = vmatmul.mubr.f32.gmra.mrb[0].mxu0 %v445
    %v513 = vpop.f32.mrb[0].mxu0
    %v514 = vadd.f32 0.0, %v513
    %v515 = vpop.f32.mrb[0].mxu0
    %516 = vdwg.mxu0
    %v517 = vadd.f32 %v443, %v514
    %v518 = vtanh.pop %v517
    %519 = vst.msk [vmem:[%s442] sm:$0x3] %vm116, %v518
    %s520 = scalar_lea.vmem [#allocation3], 10
    %v521 = vld [vmem:[%s520] sm:$0x3]
    %v523 = vsel %vm131, %v518, 0
    %525 = vmatprep.subr.mxu0 0.0
    %526 = vmatpush1.msra.mxu0 %v125
    %527 = vmatprep.subr.mxu0 0.0
    %528 = vmatpush1.msra.mxu0 %v126
    %529 = vmatprep.subr.mxu0 0.0
    %530 = vmatpush1.msra.mxu0 %v127
    %531 = vmatprep.subr.mxu0 0.0
    %532 = vmatpush1.msra.mxu0 %v128
    %533 = vmatprep.subr.mxu0 0.0
    %534 = vmatpush1.msra.mxu0 0.0
    %535 = vmatprep.subr.mxu0 0.0
    %536 = vmatpush1.msra.mxu0 0.0
    %537 = vmatprep.subr.mxu0 0.0
    %538 = vmatpush1.msra.mxu0 0.0
    %539 = vmatprep.subr.mxu0 0.0
    %540 = vmatpush1.msra.mxu0 0.0
    %541 = vmatprep.subr.mxu0 0.0
    %542 = vmatpush1.msra.mxu0 0.0
    %543 = vmatprep.subr.mxu0 0.0
    %544 = vmatpush1.msra.mxu0 0.0
    %545 = vmatprep.subr.mxu0 0.0
    %546 = vmatpush1.msra.mxu0 0.0
    %547 = vmatprep.subr.mxu0 0.0
    %548 = vmatpush1.msra.mxu0 0.0
    %549 = vmatprep.subr.mxu0 0.0
    %550 = vmatpush1.msra.mxu0 0.0
    %551 = vmatprep.subr.mxu0 0.0
    %552 = vmatpush1.msra.mxu0 0.0
    %553 = vmatprep.subr.mxu0 0.0
    %554 = vmatpush1.msra.mxu0 0.0
    %555 = vmatprep.subr.mxu0 0.0
    %556 = vmatpush1.msra.mxu0 0.0
    %557 = vmatprep.subr.mxu0 0.0
    %558 = vmatpush1.msra.mxu0 0.0
    %559 = vmatprep.subr.mxu0 0.0
    %560 = vmatpush1.msra.mxu0 0.0
    %561 = vmatprep.subr.mxu0 0.0
    %562 = vmatpush1.msra.mxu0 0.0
    %563 = vmatprep.subr.mxu0 0.0
    %564 = vmatpush1.msra.mxu0 0.0
    %565 = vmatprep.subr.mxu0 0.0
    %566 = vmatpush1.msra.mxu0 0.0
    %567 = vmatprep.subr.mxu0 0.0
    %568 = vmatpush1.msra.mxu0 0.0
    %569 = vmatprep.subr.mxu0 0.0
    %570 = vmatpush1.msra.mxu0 0.0
    %571 = vmatprep.subr.mxu0 0.0
    %572 = vmatpush1.msra.mxu0 0.0
    %573 = vmatprep.subr.mxu0 0.0
    %574 = vmatpush1.msra.mxu0 0.0
    %575 = vmatprep.subr.mxu0 0.0
    %576 = vmatpush1.msra.mxu0 0.0
    %577 = vmatprep.subr.mxu0 0.0
    %578 = vmatpush1.msra.mxu0 0.0
    %579 = vmatprep.subr.mxu0 0.0
    %580 = vmatpush1.msra.mxu0 0.0
    %581 = vmatprep.subr.mxu0 0.0
    %582 = vmatpush1.msra.mxu0 0.0
    %583 = vmatprep.subr.mxu0 0.0
    %584 = vmatpush1.msra.mxu0 0.0
    %585 = vmatprep.subr.mxu0 0.0
    %586 = vmatpush1.msra.mxu0 0.0
    %587 = vmatprep.subr.mxu0 0.0
    %588 = vmatpush1.msra.mxu0 0.0
    %589 = vmatprep.mubr.f32.mxu0 0.0
    %590 = vmatmul.mubr.f32.gmra.mrb[0].mxu0 %v523
    %v591 = vpop.f32.mrb[0].mxu0
    %v592 = vadd.f32 0.0, %v591
    %v593 = vpop.f32.mrb[0].mxu0
    %594 = vdwg.mxu0
    %v595 = vadd.f32 %v521, %v592
    %v596 = vtanh.pop %v595
    %597 = vst.msk [vmem:[%s520] sm:$0x3] %vm116, %v596
    %s598 = scalar_lea.vmem [#allocation3], 12
    %v599 = vld [vmem:[%s598] sm:$0x3]
    %v601 = vsel %vm131, %v596, 0
    %603 = vmatprep.subr.mxu0 0.0
    %604 = vmatpush1.msra.mxu0 %v125
    %605 = vmatprep.subr.mxu0 0.0
    %606 = vmatpush1.msra.mxu0 %v126
    %607 = vmatprep.subr.mxu0 0.0
    %608 = vmatpush1.msra.mxu0 %v127
    %609 = vmatprep.subr.mxu0 0.0
    %610 = vmatpush1.msra.mxu0 %v128
    %611 = vmatprep.subr.mxu0 0.0
    %612 = vmatpush1.msra.mxu0 0.0
    %613 = vmatprep.subr.mxu0 0.0
    %614 = vmatpush1.msra.mxu0 0.0
    %615 = vmatprep.subr.mxu0 0.0
    %616 = vmatpush1.msra.mxu0 0.0
    %617 = vmatprep.subr.mxu0 0.0
    %618 = vmatpush1.msra.mxu0 0.0
    %619 = vmatprep.subr.mxu0 0.0
    %620 = vmatpush1.msra.mxu0 0.0
    %621 = vmatprep.subr.mxu0 0.0
    %622 = vmatpush1.msra.mxu0 0.0
    %623 = vmatprep.subr.mxu0 0.0
    %624 = vmatpush1.msra.mxu0 0.0
    %625 = vmatprep.subr.mxu0 0.0
    %626 = vmatpush1.msra.mxu0 0.0
    %627 = vmatprep.subr.mxu0 0.0
    %628 = vmatpush1.msra.mxu0 0.0
    %629 = vmatprep.subr.mxu0 0.0
    %630 = vmatpush1.msra.mxu0 0.0
    %631 = vmatprep.subr.mxu0 0.0
    %632 = vmatpush1.msra.mxu0 0.0
    %633 = vmatprep.subr.mxu0 0.0
    %634 = vmatpush1.msra.mxu0 0.0
    %635 = vmatprep.subr.mxu0 0.0
    %636 = vmatpush1.msra.mxu0 0.0
    %637 = vmatprep.subr.mxu0 0.0
    %638 = vmatpush1.msra.mxu0 0.0
    %639 = vmatprep.subr.mxu0 0.0
    %640 = vmatpush1.msra.mxu0 0.0
    %641 = vmatprep.subr.mxu0 0.0
    %642 = vmatpush1.msra.mxu0 0.0
    %643 = vmatprep.subr.mxu0 0.0
    %644 = vmatpush1.msra.mxu0 0.0
    %645 = vmatprep.subr.mxu0 0.0
    %646 = vmatpush1.msra.mxu0 0.0
    %647 = vmatprep.subr.mxu0 0.0
    %648 = vmatpush1.msra.mxu0 0.0
    %649 = vmatprep.subr.mxu0 0.0
    %650 = vmatpush1.msra.mxu0 0.0
    %651 = vmatprep.subr.mxu0 0.0
    %652 = vmatpush1.msra.mxu0 0.0
    %653 = vmatprep.subr.mxu0 0.0
    %654 = vmatpush1.msra.mxu0 0.0
    %655 = vmatprep.subr.mxu0 0.0
    %656 = vmatpush1.msra.mxu0 0.0
    %657 = vmatprep.subr.mxu0 0.0
    %658 = vmatpush1.msra.mxu0 0.0
    %659 = vmatprep.subr.mxu0 0.0
    %660 = vmatpush1.msra.mxu0 0.0
    %661 = vmatprep.subr.mxu0 0.0
    %662 = vmatpush1.msra.mxu0 0.0
    %663 = vmatprep.subr.mxu0 0.0
    %664 = vmatpush1.msra.mxu0 0.0
    %665 = vmatprep.subr.mxu0 0.0
    %666 = vmatpush1.msra.mxu0 0.0
    %667 = vmatprep.mubr.f32.mxu0 0.0
    %668 = vmatmul.mubr.f32.gmra.mrb[0].mxu0 %v601
    %v669 = vpop.f32.mrb[0].mxu0
    %v670 = vadd.f32 0.0, %v669
    %v671 = vpop.f32.mrb[0].mxu0
    %672 = vdwg.mxu0
    %v673 = vadd.f32 %v599, %v670
    %v674 = vtanh.pop %v673
    %675 = vst.msk [vmem:[%s598] sm:$0x3] %vm116, %v674
    %s676 = scalar_lea.vmem [#allocation3], 14
    %v677 = vld [vmem:[%s676] sm:$0x3]
    %v679 = vsel %vm131, %v674, 0
    %681 = vmatprep.subr.mxu0 0.0
    %682 = vmatpush1.msra.mxu0 %v125
    %683 = vmatprep.subr.mxu0 0.0
    %684 = vmatpush1.msra.mxu0 %v126
    %685 = vmatprep.subr.mxu0 0.0
    %686 = vmatpush1.msra.mxu0 %v127
    %687 = vmatprep.subr.mxu0 0.0
    %688 = vmatpush1.msra.mxu0 %v128
    %689 = vmatprep.subr.mxu0 0.0
    %690 = vmatpush1.msra.mxu0 0.0
    %691 = vmatprep.subr.mxu0 0.0
    %692 = vmatpush1.msra.mxu0 0.0
    %693 = vmatprep.subr.mxu0 0.0
    %694 = vmatpush1.msra.mxu0 0.0
    %695 = vmatprep.subr.mxu0 0.0
    %696 = vmatpush1.msra.mxu0 0.0
    %697 = vmatprep.subr.mxu0 0.0
    %698 = vmatpush1.msra.mxu0 0.0
    %699 = vmatprep.subr.mxu0 0.0
    %700 = vmatpush1.msra.mxu0 0.0
    %701 = vmatprep.subr.mxu0 0.0
    %702 = vmatpush1.msra.mxu0 0.0
    %703 = vmatprep.subr.mxu0 0.0
    %704 = vmatpush1.msra.mxu0 0.0
    %705 = vmatprep.subr.mxu0 0.0
    %706 = vmatpush1.msra.mxu0 0.0
    %707 = vmatprep.subr.mxu0 0.0
    %708 = vmatpush1.msra.mxu0 0.0
    %709 = vmatprep.subr.mxu0 0.0
    %710 = vmatpush1.msra.mxu0 0.0
    %711 = vmatprep.subr.mxu0 0.0
    %712 = vmatpush1.msra.mxu0 0.0
    %713 = vmatprep.subr.mxu0 0.0
    %714 = vmatpush1.msra.mxu0 0.0
    %715 = vmatprep.subr.mxu0 0.0
    %716 = vmatpush1.msra.mxu0 0.0
    %717 = vmatprep.subr.mxu0 0.0
    %718 = vmatpush1.msra.mxu0 0.0
    %719 = vmatprep.subr.mxu0 0.0
    %720 = vmatpush1.msra.mxu0 0.0
    %721 = vmatprep.subr.mxu0 0.0
    %722 = vmatpush1.msra.mxu0 0.0
    %723 = vmatprep.subr.mxu0 0.0
    %724 = vmatpush1.msra.mxu0 0.0
    %725 = vmatprep.subr.mxu0 0.0
    %726 = vmatpush1.msra.mxu0 0.0
    %727 = vmatprep.subr.mxu0 0.0
    %728 = vmatpush1.msra.mxu0 0.0
    %729 = vmatprep.subr.mxu0 0.0
    %730 = vmatpush1.msra.mxu0 0.0
    %731 = vmatprep.subr.mxu0 0.0
    %732 = vmatpush1.msra.mxu0 0.0
    %733 = vmatprep.subr.mxu0 0.0
    %734 = vmatpush1.msra.mxu0 0.0
    %735 = vmatprep.subr.mxu0 0.0
    %736 = vmatpush1.msra.mxu0 0.0
    %737 = vmatprep.subr.mxu0 0.0
    %738 = vmatpush1.msra.mxu0 0.0
    %739 = vmatprep.subr.mxu0 0.0
    %740 = vmatpush1.msra.mxu0 0.0
    %741 = vmatprep.subr.mxu0 0.0
    %742 = vmatpush1.msra.mxu0 0.0
    %743 = vmatprep.subr.mxu0 0.0
    %744 = vmatpush1.msra.mxu0 0.0
    %745 = vmatprep.mubr.f32.mxu0 0.0
    %746 = vmatmul.mubr.f32.gmra.mrb[0].mxu0 %v679
    %v747 = vpop.f32.mrb[0].mxu0
    %v748 = vadd.f32 0.0, %v747
    %v749 = vpop.f32.mrb[0].mxu0
    %750 = vdwg.mxu0
    %v751 = vadd.f32 %v677, %v748
    %v752 = vtanh.pop %v751
    %753 = vst.msk [vmem:[%s676] sm:$0x3] %vm116, %v752
    %754 = vst.msk [vmem:[#allocation2] sm:$0x3] %vm116, %v752
    %v755 = vld [vmem:[#allocation3] sm:$0x3]
    %v756 = vld [vmem:[#allocation3 + $0x2] sm:$0x3]
    %v757 = vld [vmem:[#allocation3 + $0x4] sm:$0x3]
    %v758 = vld [vmem:[#allocation3 + $0x6] sm:$0x3]
    %v759 = vld [vmem:[#allocation3 + $0x8] sm:$0x3]
    %v760 = vld [vmem:[#allocation3 + $0xa] sm:$0x3]
    %v761 = vld [vmem:[#allocation3 + $0xc] sm:$0x3]
    %v762 = vld [vmem:[#allocation3 + $0xe] sm:$0x3]
    %v763 = vld [vmem:[%s5] sm:$0x1]
    %v765 = vlaneseq
    %v766 = vshrl.u32 %v765, 7
    %v767 = vsub.s32 0, %v766
    %v768 = vrot.slane %v763, %v767
    %v770 = vmul.f32 %v755, %v768
    %v771 = vmul.f32 %v756, %v768
    %v772 = vmul.f32 %v757, %v768
    %v773 = vmul.f32 %v758, %v768
    %v774 = vmul.f32 %v759, %v768
    %v775 = vmul.f32 %v760, %v768
    %v776 = vmul.f32 %v761, %v768
    %v777 = vmul.f32 %v762, %v768
    %v778 = vsel %vm116, %v770, 0.0
    %779 = vadd.xlane.f32.xlu0 %v778
    %v780 = vpop.xlane.xlu0 %779
    %v781 = vsel %vm116, %v771, 0.0
    %782 = vadd.xlane.f32.xlu0 %v781
    %v783 = vpop.xlane.xlu0 %782
    %v784 = vsel %vm116, %v772, 0.0
    %785 = vadd.xlane.f32.xlu0 %v784
    %v786 = vpop.xlane.xlu0 %785
    %v787 = vsel %vm116, %v773, 0.0
    %788 = vadd.xlane.f32.xlu0 %v787
    %v789 = vpop.xlane.xlu0 %788
    %v790 = vsel %vm116, %v774, 0.0
    %791 = vadd.xlane.f32.xlu0 %v790
    %v792 = vpop.xlane.xlu0 %791
    %v793 = vsel %vm116, %v775, 0.0
    %794 = vadd.xlane.f32.xlu0 %v793
    %v795 = vpop.xlane.xlu0 %794
    %v796 = vsel %vm116, %v776, 0.0
    %797 = vadd.xlane.f32.xlu0 %v796
    %v798 = vpop.xlane.xlu0 %797
    %v799 = vsel %vm116, %v777, 0.0
    %800 = vadd.xlane.f32.xlu0 %v799
    %v801 = vpop.xlane.xlu0 %800
    %v802 = vld [vmem:[#allocation4] sm:$0x1]
    %v804 = vlaneseq
    %v805 = vshrl.u32 %v804, 7
    %v806 = vsub.s32 0, %v805
    %v807 = vrot.slane %v802, %v806
    %808 = vset.pattern.permute.xlu0 0
    %809 = vperm.xlu0 %808, %v807
    %v810 = vpop.permute.xlu0 %809
    %v812 = vadd.f32 %v780, %v810
    %v813 = vadd.f32 %v783, %v810
    %v814 = vadd.f32 %v786, %v810
    %v815 = vadd.f32 %v789, %v810
    %v816 = vadd.f32 %v792, %v810
    %v817 = vadd.f32 %v795, %v810
    %v818 = vadd.f32 %v798, %v810
    %v819 = vadd.f32 %v801, %v810
    %v828 = vlaneseq
    %v829 = vand.u32 %v828, 127
    %v830 = vlaneseq
    %v831 = vshrl.u32 %v830, 7
    %v832 = vsub.s32 %v829, %v831
    %v833 = vrot.slane %v812, %v832
    %v834 = vlaneseq
    %v835 = vshrl.u32 %v834, 7
    %v836 = vsub.s32 %v829, %v835
    %v837 = vrot.slane %v813, %v836
    %v838 = vlaneseq
    %v839 = vshrl.u32 %v838, 7
    %v840 = vsub.s32 %v829, %v839
    %v841 = vrot.slane %v814, %v840
    %v842 = vlaneseq
    %v843 = vshrl.u32 %v842, 7
    %v844 = vsub.s32 %v829, %v843
    %v845 = vrot.slane %v815, %v844
    %v846 = vlaneseq
    %v847 = vshrl.u32 %v846, 7
    %v848 = vsub.s32 %v829, %v847
    %v849 = vrot.slane %v816, %v848
    %v850 = vlaneseq
    %v851 = vshrl.u32 %v850, 7
    %v852 = vsub.s32 %v829, %v851
    %v853 = vrot.slane %v817, %v852
    %v854 = vlaneseq
    %v855 = vshrl.u32 %v854, 7
    %v856 = vsub.s32 %v829, %v855
    %v857 = vrot.slane %v818, %v856
    %v858 = vlaneseq
    %v859 = vshrl.u32 %v858, 7
    %v860 = vsub.s32 %v829, %v859
    %v861 = vrot.slane %v819, %v860
    %vm862 = vcmask 1041409
    %v863 = vsel %vm862, %v837, %v833
    %vm864 = vcmask 1042434
    %v865 = vsel %vm864, %v841, %v863
    %vm866 = vcmask 1043459
    %v867 = vsel %vm866, %v845, %v865
    %vm868 = vcmask 1044484
    %v869 = vsel %vm868, %v849, %v867
    %vm870 = vcmask 1045509
    %v871 = vsel %vm870, %v853, %v869
    %vm872 = vcmask 1046534
    %v873 = vsel %vm872, %v857, %v871
    %vm874 = vcmask 1047559
    %v875 = vsel %vm874, %v861, %v873
    %vm877 = vcmask 15360
    %878 = vst.msk [vmem:[%s7] sm:$0xff] %vm877, %v875
    // Predicated region
    $region34: #{rnn_forward.1} parent=1 // pred_check
      %p879 = pneg %p31
    $region35: #{rnn_forward.1} parent=1 // pred_check_branch
      %881 = sbr.rel (%p879) target = $region37
    $region36: #{rnn_forward.1} parent=1 // pred_region
      %882 = vst.msk [vmem:[#allocation5] sm:$0x3] %vm116, %v752
    $region37: #{rnn_forward.1} parent=1 // pred_fallthru
      _
    // Predicated region
    $region38: #{rnn_forward.1} parent=1 // pred_check
      _
    $region39: #{rnn_forward.1} parent=1 // pred_check_branch
      %884 = sbr.rel (0) target = $region41
    $region40: #{rnn_forward.1} parent=1 // pred_region
      _
    $region41: #{rnn_forward.1} parent=1 // pred_fallthru
      _
    // Predicated region
    $region42: #{rnn_forward.1} parent=1 // pred_check
      _
    $region43: #{rnn_forward.1} parent=1 // pred_check_branch
      %886 = sbr.rel (0) target = $region45
    $region44: #{rnn_forward.1} parent=1 // pred_region
      %s888 = ssub.s32 32, 32
      %889 = vsyncadd [#allocation6], %s888
      %s891 = sshll.u32 [#allocation5], 4
      %s892 = int_to_ptr.vmem [resolvable:$true] %s891
      %894 = dma.vmem_to_hbm [thread:$0]  %s892, 32, %s8, [#allocation6]
    $region45: #{rnn_forward.1} parent=1 // pred_fallthru
      _
    // Predicated region
    $region46: #{rnn_forward.1} parent=1 // pred_check
      _
    $region47: #{rnn_forward.1} parent=1 // pred_check_branch
      %896 = sbr.rel (0) target = $region49
    $region48: #{rnn_forward.1} parent=1 // pred_region
      _
    $region49: #{rnn_forward.1} parent=1 // pred_fallthru
      _
    // Predicated region
    $region50: #{rnn_forward.1} parent=1 // pred_check
      _
    $region51: #{rnn_forward.1} parent=1 // pred_check_branch
      %898 = sbr.rel (0) target = $region53
    $region52: #{rnn_forward.1} parent=1 // pred_region
      %899 = dma.done [#allocation6], 32
    $region53: #{rnn_forward.1} parent=1 // pred_fallthru
      _
    %900 = vsyncpa [#allocation6], 1

</llo_original>
